<compile_context>
chip_gen: v5e
topology: v5e:2x2
jax: 0.10.0
libtpu: 0.0.40
codegen_flags: <defaults>
</compile_context>

<pallas_src>
import math

import jax
import jax.numpy as jnp
import numpy as np
from jax.experimental import pallas as pl
from jax.experimental.pallas import tpu as pltpu


# ----------------------------- config (small) -----------------------------
B = 2          # batch
S = 8          # seq length
D = 32         # d_model
H = 4          # num_heads
DKV = 8        # d_kv (key_value_proj_dim)
INNER = H * DKV
BS = B * S
NUM_BUCKETS = 32
MAX_DISTANCE = 128
EPS = 1e-6     # layer_norm_epsilon
NEG_INF = -1e9  # cross-batch mask value (exp underflows to exactly 0 in f32)


# ------------------------- relative position bias -------------------------
# Integer bucket math + embedding gather stay in plain-JAX glue (cheap, done
# once per call outside the hot path); the kernel consumes the dense bias.
def _relative_position_bucket(relative_position, bidirectional=True,
                              num_buckets=32, max_distance=128):
    relative_buckets = jnp.zeros_like(relative_position)
    if bidirectional:
        num_buckets //= 2
        relative_buckets += (relative_position > 0).astype(jnp.int32) * num_buckets
        relative_position = jnp.abs(relative_position)
    else:
        relative_position = -jnp.minimum(relative_position,
                                         jnp.zeros_like(relative_position))
    max_exact = num_buckets // 2
    is_small = relative_position < max_exact
    rel_f = relative_position.astype(jnp.float32)
    rel_if_large = max_exact + (
        jnp.log(jnp.maximum(rel_f, 1.0) / max_exact)
        / math.log(max_distance / max_exact)
        * (num_buckets - max_exact)
    ).astype(jnp.int32)
    rel_if_large = jnp.minimum(rel_if_large, num_buckets - 1)
    relative_buckets += jnp.where(is_small, relative_position, rel_if_large)
    return relative_buckets


def compute_position_bias(rel_emb, query_length, key_length):
    # rel_emb: (num_buckets, H)  ->  bias: (H, query_length, key_length)
    ctx = jnp.arange(query_length, dtype=jnp.int32)[:, None]
    mem = jnp.arange(key_length, dtype=jnp.int32)[None, :]
    rel_pos = mem - ctx
    buckets = _relative_position_bucket(rel_pos, bidirectional=True,
                                        num_buckets=NUM_BUCKETS,
                                        max_distance=MAX_DISTANCE)
    values = rel_emb[buckets]                 # (q, k, H)
    return jnp.transpose(values, (2, 0, 1))   # (H, q, k)


# -------------------------------- kernel ----------------------------------
def t5_self_attn_kernel(x_ref, lnw_ref, wqkv_ref, wo_ref, bias_ref,
                        o_ref, ctx_ref):
    # Blocks: x_ref (BS, D); lnw_ref (1, D); wqkv_ref (D, 3*INNER);
    #         wo_ref (INNER, D); bias_ref (H, BS, BS) block-diagonal+masked;
    #         o_ref (BS, D); ctx_ref VMEM scratch (BS, INNER).
    x = x_ref[...]                                             # (BS, D) f32

    # T5LayerNorm (RMS norm, scale only, no mean-subtraction, no bias)
    var = jnp.mean(x * x, axis=-1, keepdims=True)              # (BS, 1)
    normed = x * jax.lax.rsqrt(var + EPS) * lnw_ref[...]       # (BS, D)

    # Fused Q/K/V projection (single matmul; no bias, no 1/sqrt(d) scaling)
    qkv = jnp.dot(normed, wqkv_ref[...],
                  preferred_element_type=jnp.float32)          # (BS, 3*INNER)

    # Per-head attention; both batch items processed at once — cross-batch
    # entries are killed by the -1e9 block-diagonal mask baked into bias_ref.
    for h in range(H):
        qh = qkv[:, h * DKV:(h + 1) * DKV]                             # (BS, DKV)
        kh = qkv[:, INNER + h * DKV:INNER + (h + 1) * DKV]             # (BS, DKV)
        vh = qkv[:, 2 * INNER + h * DKV:2 * INNER + (h + 1) * DKV]     # (BS, DKV)

        # q @ k^T without an explicit transpose: contract last dims directly.
        scores = jax.lax.dot_general(
            qh, kh, (((1,), (1,)), ((), ())),
            preferred_element_type=jnp.float32)                        # (BS, BS)
        scores = scores + bias_ref[h]

        m = jnp.max(scores, axis=-1, keepdims=True)
        p = jnp.exp(scores - m)
        w = p * pl.reciprocal(jnp.sum(p, axis=-1, keepdims=True), approx=True)

        # Write this head's context into scratch at a static lane offset
        # (replaces jnp.concatenate).
        ctx_ref[:, h * DKV:(h + 1) * DKV] = jnp.dot(
            w, vh, preferred_element_type=jnp.float32)                 # (BS, DKV)

    # Output projection + residual; single contiguous writeback.
    y = jnp.dot(ctx_ref[...], wo_ref[...], preferred_element_type=jnp.float32)
    o_ref[...] = (x + y).astype(o_ref.dtype)


# -------------------------------- wrapper ----------------------------------
@jax.jit
def t5_layer_self_attention(x, ln_w, wq, wk, wv, wo, rel_emb):
    """x: (B, S, D); weights in PyTorch layout (out, in); rel_emb (buckets, H)."""
    # TODO(synk): in a real model, precompute/cached the position bias outside
    # the per-call path instead of recomputing it here.
    bias = compute_position_bias(rel_emb, S, S)                  # (H, S, S)

    # Block-diagonal bias over the flattened (B*S) axis; cross-batch = -1e9.
    bias_blk = jnp.full((H, BS, BS), NEG_INF, dtype=jnp.float32)
    for b in range(B):
        bias_blk = bias_blk.at[:, b * S:(b + 1) * S, b * S:(b + 1) * S].set(bias)

    wqkv_t = jnp.concatenate([wq.T, wk.T, wv.T], axis=1)         # (D, 3*INNER)
    x_flat = x.reshape(BS, D)

    grid_spec = pltpu.PrefetchScalarGridSpec(
        num_scalar_prefetch=0,
        grid=(1,),                       # single step: no per-batch pipeline overhead
        in_specs=[
            pl.BlockSpec((BS, D), lambda i: (0, 0)),             # x (flattened)
            pl.BlockSpec((1, D), lambda i: (0, 0)),              # ln weight
            pl.BlockSpec((D, 3 * INNER), lambda i: (0, 0)),      # fused Wqkv^T
            pl.BlockSpec((INNER, D), lambda i: (0, 0)),          # Wo^T
            pl.BlockSpec((H, BS, BS), lambda i: (0, 0, 0)),      # masked bias
        ],
        out_specs=pl.BlockSpec((BS, D), lambda i: (0, 0)),
        scratch_shapes=[pltpu.VMEM((BS, INNER), jnp.float32)],   # per-head ctx
    )
    fn = pl.pallas_call(
        t5_self_attn_kernel,
        out_shape=jax.ShapeDtypeStruct((BS, D), jnp.float32),
        grid_spec=grid_spec,
        compiler_params=pltpu.CompilerParams(
            dimension_semantics=("arbitrary",)),
    )
    out_flat = fn(x_flat, ln_w.reshape(1, D), wqkv_t, wo.T, bias_blk)
    return out_flat.reshape(B, S, D)


# --------------------------- pure-JAX reference ----------------------------
def reference(x, ln_w, wq, wk, wv, wo, rel_emb):
    bias = compute_position_bias(rel_emb, S, S)                  # (H, S, S)
    var = jnp.mean(x * x, axis=-1, keepdims=True)
    normed = x * jax.lax.rsqrt(var + EPS) * ln_w
    q = normed @ wq.T
    k = normed @ wk.T
    v = normed @ wv.T
    qh = q.reshape(B, S, H, DKV).transpose(0, 2, 1, 3)
    kh = k.reshape(B, S, H, DKV).transpose(0, 2, 1, 3)
    vh = v.reshape(B, S, H, DKV).transpose(0, 2, 1, 3)
    scores = jnp.einsum("bhqd,bhkd->bhqk", qh, kh) + bias[None]
    w = jax.nn.softmax(scores, axis=-1)
    ctx = jnp.einsum("bhqk,bhkd->bhqd", w, vh)
    ctx = ctx.transpose(0, 2, 1, 3).reshape(B, S, INNER)
    return x + ctx @ wo.T


# ----------------------------------- main ----------------------------------
if __name__ == "__main__":
    key = jax.random.PRNGKey(0)
    k_x, k_q, k_k, k_v, k_o, k_r = jax.random.split(key, 6)

    x = jax.random.normal(k_x, (B, S, D), dtype=jnp.float32)
    ln_w = jnp.ones((D,), dtype=jnp.float32)                      # T5LayerNorm init
    wq = jax.random.normal(k_q, (INNER, D), dtype=jnp.float32) * 0.05
    wk = jax.random.normal(k_k, (INNER, D), dtype=jnp.float32) * 0.05
    wv = jax.random.normal(k_v, (INNER, D), dtype=jnp.float32) * 0.05
    wo = jax.random.normal(k_o, (D, INNER), dtype=jnp.float32) * 0.05   # (out=d_model, in=inner)
    rel_emb = jax.random.normal(k_r, (NUM_BUCKETS, H), dtype=jnp.float32) * 0.1

    out = t5_layer_self_attention(x, ln_w, wq, wk, wv, wo, rel_emb)
    out = jax.block_until_ready(out)

    ref = reference(x, ln_w, wq, wk, wv, wo, rel_emb)
    # approx=True reciprocal in the softmax denominator -> slightly looser tol.
    np.testing.assert_allclose(np.asarray(out), np.asarray(ref),
                               rtol=1e-3, atol=1e-3)

    print("KERNEL_OK")
</pallas_src>

<mosaic_0001>
module attributes {stable_mosaic.version = 11 : i64} {
  func.func @t5_self_attn_kernel(%arg0: i32, %arg1: memref<16x32xf32, #tpu.memory_space<vmem>>, %arg2: memref<1x32xf32, #tpu.memory_space<vmem>>, %arg3: memref<32x96xf32, #tpu.memory_space<vmem>>, %arg4: memref<32x32xf32, #tpu.memory_space<vmem>>, %arg5: memref<4x16x16xf32, #tpu.memory_space<vmem>>, %arg6: memref<16x32xf32, #tpu.memory_space<vmem>>, %arg7: memref<16x32xf32, #tpu.memory_space<vmem>>) attributes {dimension_semantics = [#tpu.dimension_semantics<arbitrary>], iteration_bounds = array<i64: 1>, scalar_prefetch = 0 : i64, scratch_operands = 1 : i64, tpu.core_type = #tpu.core_type<tc>, window_params = [{pipeline_mode = #tpu.pipeline_mode<synchronous>, transform_indices = @transform_0, window_bounds = array<i64: 16, 32>}, {pipeline_mode = #tpu.pipeline_mode<synchronous>, transform_indices = @transform_1, window_bounds = array<i64: 1, 32>}, {pipeline_mode = #tpu.pipeline_mode<synchronous>, transform_indices = @transform_2, window_bounds = array<i64: 32, 96>}, {pipeline_mode = #tpu.pipeline_mode<synchronous>, transform_indices = @transform_3, window_bounds = array<i64: 32, 32>}, {pipeline_mode = #tpu.pipeline_mode<synchronous>, transform_indices = @transform_4, window_bounds = array<i64: 4, 16, 16>}, {pipeline_mode = #tpu.pipeline_mode<synchronous>, transform_indices = @transform_5, window_bounds = array<i64: 16, 32>}]} {
    %c0 = arith.constant 0 : index
    %c0_0 = arith.constant 0 : index
    %0 = vector.load %arg1[%c0, %c0_0] : memref<16x32xf32, #tpu.memory_space<vmem>>, vector<16x32xf32>
    %1 = arith.mulf %0, %0 : vector<16x32xf32>
    %cst = arith.constant dense<0.000000e+00> : vector<16xf32>
    %2 = vector.multi_reduction <add>, %1, %cst [1] : vector<16x32xf32> to vector<16xf32>
    %3 = vector.shape_cast %2 : vector<16xf32> to vector<16x1xf32>
    %cst_1 = arith.constant 3.200000e+01 : f32
    %4 = vector.broadcast %cst_1 : f32 to vector<16x1xf32>
    %5 = arith.divf %3, %4 : vector<16x1xf32>
    %cst_2 = arith.constant 9.99999997E-7 : f32
    %6 = vector.broadcast %cst_2 : f32 to vector<16x1xf32>
    %7 = arith.addf %5, %6 : vector<16x1xf32>
    %8 = math.rsqrt %7 : vector<16x1xf32>
    %9 = vector.broadcast %8 : vector<16x1xf32> to vector<16x32xf32>
    %10 = arith.mulf %0, %9 : vector<16x32xf32>
    %c0_3 = arith.constant 0 : index
    %c0_4 = arith.constant 0 : index
    %11 = vector.load %arg2[%c0_3, %c0_4] : memref<1x32xf32, #tpu.memory_space<vmem>>, vector<1x32xf32>
    %12 = vector.broadcast %11 : vector<1x32xf32> to vector<16x32xf32>
    %13 = arith.mulf %10, %12 : vector<16x32xf32>
    %c0_5 = arith.constant 0 : index
    %c0_6 = arith.constant 0 : index
    %14 = vector.load %arg3[%c0_5, %c0_6] : memref<32x96xf32, #tpu.memory_space<vmem>>, vector<32x96xf32>
    %cst_7 = arith.constant dense<0.000000e+00> : vector<16x96xf32>
    %15 = tpu.matmul %13, %14, %cst_7 {dimension_numbers = #tpu.dot_dimension_numbers<[1], [0], [0], [1], [0, 0, 1, 1], [], []>} : vector<16x32xf32>, vector<32x96xf32>, vector<16x96xf32> -> vector<16x96xf32>
    %16 = vector.extract_strided_slice %15 {offsets = [0, 0], sizes = [16, 8], strides = [1, 1]} : vector<16x96xf32> to vector<16x8xf32>
    %17 = vector.extract_strided_slice %15 {offsets = [0, 32], sizes = [16, 8], strides = [1, 1]} : vector<16x96xf32> to vector<16x8xf32>
    %18 = vector.extract_strided_slice %15 {offsets = [0, 64], sizes = [16, 8], strides = [1, 1]} : vector<16x96xf32> to vector<16x8xf32>
    %cst_8 = arith.constant dense<0.000000e+00> : vector<16x16xf32>
    %19 = tpu.matmul %16, %17, %cst_8 {dimension_numbers = #tpu.dot_dimension_numbers<[1], [1], [0], [0], [0, 0, 1, 0], [], []>} : vector<16x8xf32>, vector<16x8xf32>, vector<16x16xf32> -> vector<16x16xf32>
    %c0_9 = arith.constant 0 : index
    %c0_10 = arith.constant 0 : index
    %c0_11 = arith.constant 0 : index
    %20 = vector.load %arg5[%c0_9, %c0_10, %c0_11] : memref<4x16x16xf32, #tpu.memory_space<vmem>>, vector<1x16x16xf32>
    %21 = vector.shape_cast %20 : vector<1x16x16xf32> to vector<16x16xf32>
    %22 = arith.addf %19, %21 : vector<16x16xf32>
    %cst_12 = arith.constant dense<0xFF800000> : vector<16xf32>
    %23 = vector.multi_reduction <maximumf>, %22, %cst_12 [1] : vector<16x16xf32> to vector<16xf32>
    %24 = vector.shape_cast %23 : vector<16xf32> to vector<16x1xf32>
    %25 = vector.broadcast %24 : vector<16x1xf32> to vector<16x16xf32>
    %26 = arith.subf %22, %25 : vector<16x16xf32>
    %27 = math.exp %26 : vector<16x16xf32>
    %cst_13 = arith.constant dense<0.000000e+00> : vector<16xf32>
    %28 = vector.multi_reduction <add>, %27, %cst_13 [1] : vector<16x16xf32> to vector<16xf32>
    %29 = vector.shape_cast %28 : vector<16xf32> to vector<16x1xf32>
    %30 = tpu.reciprocal %29 {approx = true} : vector<16x1xf32> -> vector<16x1xf32>
    %31 = vector.broadcast %30 : vector<16x1xf32> to vector<16x16xf32>
    %32 = arith.mulf %27, %31 : vector<16x16xf32>
    %cst_14 = arith.constant dense<0.000000e+00> : vector<16x8xf32>
    %33 = tpu.matmul %32, %18, %cst_14 {dimension_numbers = #tpu.dot_dimension_numbers<[1], [0], [0], [1], [0, 0, 1, 1], [], []>} : vector<16x16xf32>, vector<16x8xf32>, vector<16x8xf32> -> vector<16x8xf32>
    %c0_15 = arith.constant 0 : index
    %c0_16 = arith.constant 0 : index
    %34 = vector.load %arg7[%c0_15, %c0_16] : memref<16x32xf32, #tpu.memory_space<vmem>>, vector<16x8xf32>
    tpu.vector_store %arg7[%c0_15, %c0_16], %33 {strides = array<i32>} : memref<16x32xf32, #tpu.memory_space<vmem>>, vector<16x8xf32>,
    %35 = vector.extract_strided_slice %15 {offsets = [0, 8], sizes = [16, 8], strides = [1, 1]} : vector<16x96xf32> to vector<16x8xf32>
    %36 = vector.extract_strided_slice %15 {offsets = [0, 40], sizes = [16, 8], strides = [1, 1]} : vector<16x96xf32> to vector<16x8xf32>
    %37 = vector.extract_strided_slice %15 {offsets = [0, 72], sizes = [16, 8], strides = [1, 1]} : vector<16x96xf32> to vector<16x8xf32>
    %cst_17 = arith.constant dense<0.000000e+00> : vector<16x16xf32>
    %38 = tpu.matmul %35, %36, %cst_17 {dimension_numbers = #tpu.dot_dimension_numbers<[1], [1], [0], [0], [0, 0, 1, 0], [], []>} : vector<16x8xf32>, vector<16x8xf32>, vector<16x16xf32> -> vector<16x16xf32>
    %c1 = arith.constant 1 : index
    %c0_18 = arith.constant 0 : index
    %c0_19 = arith.constant 0 : index
    %39 = vector.load %arg5[%c1, %c0_18, %c0_19] : memref<4x16x16xf32, #tpu.memory_space<vmem>>, vector<1x16x16xf32>
    %40 = vector.shape_cast %39 : vector<1x16x16xf32> to vector<16x16xf32>
    %41 = arith.addf %38, %40 : vector<16x16xf32>
    %cst_20 = arith.constant dense<0xFF800000> : vector<16xf32>
    %42 = vector.multi_reduction <maximumf>, %41, %cst_20 [1] : vector<16x16xf32> to vector<16xf32>
    %43 = vector.shape_cast %42 : vector<16xf32> to vector<16x1xf32>
    %44 = vector.broadcast %43 : vector<16x1xf32> to vector<16x16xf32>
    %45 = arith.subf %41, %44 : vector<16x16xf32>
    %46 = math.exp %45 : vector<16x16xf32>
    %cst_21 = arith.constant dense<0.000000e+00> : vector<16xf32>
    %47 = vector.multi_reduction <add>, %46, %cst_21 [1] : vector<16x16xf32> to vector<16xf32>
    %48 = vector.shape_cast %47 : vector<16xf32> to vector<16x1xf32>
    %49 = tpu.reciprocal %48 {approx = true} : vector<16x1xf32> -> vector<16x1xf32>
    %50 = vector.broadcast %49 : vector<16x1xf32> to vector<16x16xf32>
    %51 = arith.mulf %46, %50 : vector<16x16xf32>
    %cst_22 = arith.constant dense<0.000000e+00> : vector<16x8xf32>
    %52 = tpu.matmul %51, %37, %cst_22 {dimension_numbers = #tpu.dot_dimension_numbers<[1], [0], [0], [1], [0, 0, 1, 1], [], []>} : vector<16x16xf32>, vector<16x8xf32>, vector<16x8xf32> -> vector<16x8xf32>
    %c0_23 = arith.constant 0 : index
    %c8 = arith.constant 8 : index
    %53 = vector.load %arg7[%c0_23, %c8] : memref<16x32xf32, #tpu.memory_space<vmem>>, vector<16x8xf32>
    tpu.vector_store %arg7[%c0_23, %c8], %52 {strides = array<i32>} : memref<16x32xf32, #tpu.memory_space<vmem>>, vector<16x8xf32>,
    %54 = vector.extract_strided_slice %15 {offsets = [0, 16], sizes = [16, 8], strides = [1, 1]} : vector<16x96xf32> to vector<16x8xf32>
    %55 = vector.extract_strided_slice %15 {offsets = [0, 48], sizes = [16, 8], strides = [1, 1]} : vector<16x96xf32> to vector<16x8xf32>
    %56 = vector.extract_strided_slice %15 {offsets = [0, 80], sizes = [16, 8], strides = [1, 1]} : vector<16x96xf32> to vector<16x8xf32>
    %cst_24 = arith.constant dense<0.000000e+00> : vector<16x16xf32>
    %57 = tpu.matmul %54, %55, %cst_24 {dimension_numbers = #tpu.dot_dimension_numbers<[1], [1], [0], [0], [0, 0, 1, 0], [], []>} : vector<16x8xf32>, vector<16x8xf32>, vector<16x16xf32> -> vector<16x16xf32>
    %c2 = arith.constant 2 : index
    %c0_25 = arith.constant 0 : index
    %c0_26 = arith.constant 0 : index
    %58 = vector.load %arg5[%c2, %c0_25, %c0_26] : memref<4x16x16xf32, #tpu.memory_space<vmem>>, vector<1x16x16xf32>
    %59 = vector.shape_cast %58 : vector<1x16x16xf32> to vector<16x16xf32>
    %60 = arith.addf %57, %59 : vector<16x16xf32>
    %cst_27 = arith.constant dense<0xFF800000> : vector<16xf32>
    %61 = vector.multi_reduction <maximumf>, %60, %cst_27 [1] : vector<16x16xf32> to vector<16xf32>
    %62 = vector.shape_cast %61 : vector<16xf32> to vector<16x1xf32>
    %63 = vector.broadcast %62 : vector<16x1xf32> to vector<16x16xf32>
    %64 = arith.subf %60, %63 : vector<16x16xf32>
    %65 = math.exp %64 : vector<16x16xf32>
    %cst_28 = arith.constant dense<0.000000e+00> : vector<16xf32>
    %66 = vector.multi_reduction <add>, %65, %cst_28 [1] : vector<16x16xf32> to vector<16xf32>
    %67 = vector.shape_cast %66 : vector<16xf32> to vector<16x1xf32>
    %68 = tpu.reciprocal %67 {approx = true} : vector<16x1xf32> -> vector<16x1xf32>
    %69 = vector.broadcast %68 : vector<16x1xf32> to vector<16x16xf32>
    %70 = arith.mulf %65, %69 : vector<16x16xf32>
    %cst_29 = arith.constant dense<0.000000e+00> : vector<16x8xf32>
    %71 = tpu.matmul %70, %56, %cst_29 {dimension_numbers = #tpu.dot_dimension_numbers<[1], [0], [0], [1], [0, 0, 1, 1], [], []>} : vector<16x16xf32>, vector<16x8xf32>, vector<16x8xf32> -> vector<16x8xf32>
    %c0_30 = arith.constant 0 : index
    %c16 = arith.constant 16 : index
    %72 = vector.load %arg7[%c0_30, %c16] : memref<16x32xf32, #tpu.memory_space<vmem>>, vector<16x8xf32>
    tpu.vector_store %arg7[%c0_30, %c16], %71 {strides = array<i32>} : memref<16x32xf32, #tpu.memory_space<vmem>>, vector<16x8xf32>,
    %73 = vector.extract_strided_slice %15 {offsets = [0, 24], sizes = [16, 8], strides = [1, 1]} : vector<16x96xf32> to vector<16x8xf32>
    %74 = vector.extract_strided_slice %15 {offsets = [0, 56], sizes = [16, 8], strides = [1, 1]} : vector<16x96xf32> to vector<16x8xf32>
    %75 = vector.extract_strided_slice %15 {offsets = [0, 88], sizes = [16, 8], strides = [1, 1]} : vector<16x96xf32> to vector<16x8xf32>
    %cst_31 = arith.constant dense<0.000000e+00> : vector<16x16xf32>
    %76 = tpu.matmul %73, %74, %cst_31 {dimension_numbers = #tpu.dot_dimension_numbers<[1], [1], [0], [0], [0, 0, 1, 0], [], []>} : vector<16x8xf32>, vector<16x8xf32>, vector<16x16xf32> -> vector<16x16xf32>
    %c3 = arith.constant 3 : index
    %c0_32 = arith.constant 0 : index
    %c0_33 = arith.constant 0 : index
    %77 = vector.load %arg5[%c3, %c0_32, %c0_33] : memref<4x16x16xf32, #tpu.memory_space<vmem>>, vector<1x16x16xf32>
    %78 = vector.shape_cast %77 : vector<1x16x16xf32> to vector<16x16xf32>
    %79 = arith.addf %76, %78 : vector<16x16xf32>
    %cst_34 = arith.constant dense<0xFF800000> : vector<16xf32>
    %80 = vector.multi_reduction <maximumf>, %79, %cst_34 [1] : vector<16x16xf32> to vector<16xf32>
    %81 = vector.shape_cast %80 : vector<16xf32> to vector<16x1xf32>
    %82 = vector.broadcast %81 : vector<16x1xf32> to vector<16x16xf32>
    %83 = arith.subf %79, %82 : vector<16x16xf32>
    %84 = math.exp %83 : vector<16x16xf32>
    %cst_35 = arith.constant dense<0.000000e+00> : vector<16xf32>
    %85 = vector.multi_reduction <add>, %84, %cst_35 [1] : vector<16x16xf32> to vector<16xf32>
    %86 = vector.shape_cast %85 : vector<16xf32> to vector<16x1xf32>
    %87 = tpu.reciprocal %86 {approx = true} : vector<16x1xf32> -> vector<16x1xf32>
    %88 = vector.broadcast %87 : vector<16x1xf32> to vector<16x16xf32>
    %89 = arith.mulf %84, %88 : vector<16x16xf32>
    %cst_36 = arith.constant dense<0.000000e+00> : vector<16x8xf32>
    %90 = tpu.matmul %89, %75, %cst_36 {dimension_numbers = #tpu.dot_dimension_numbers<[1], [0], [0], [1], [0, 0, 1, 1], [], []>} : vector<16x16xf32>, vector<16x8xf32>, vector<16x8xf32> -> vector<16x8xf32>
    %c0_37 = arith.constant 0 : index
    %c24 = arith.constant 24 : index
    %91 = vector.load %arg7[%c0_37, %c24] : memref<16x32xf32, #tpu.memory_space<vmem>>, vector<16x8xf32>
    tpu.vector_store %arg7[%c0_37, %c24], %90 {strides = array<i32>} : memref<16x32xf32, #tpu.memory_space<vmem>>, vector<16x8xf32>,
    %c0_38 = arith.constant 0 : index
    %c0_39 = arith.constant 0 : index
    %92 = vector.load %arg7[%c0_38, %c0_39] : memref<16x32xf32, #tpu.memory_space<vmem>>, vector<16x32xf32>
    %c0_40 = arith.constant 0 : index
    %c0_41 = arith.constant 0 : index
    %93 = vector.load %arg4[%c0_40, %c0_41] : memref<32x32xf32, #tpu.memory_space<vmem>>, vector<32x32xf32>
    %cst_42 = arith.constant dense<0.000000e+00> : vector<16x32xf32>
    %94 = tpu.matmul %92, %93, %cst_42 {dimension_numbers = #tpu.dot_dimension_numbers<[1], [0], [0], [1], [0, 0, 1, 1], [], []>} : vector<16x32xf32>, vector<32x32xf32>, vector<16x32xf32> -> vector<16x32xf32>
    %95 = arith.addf %0, %94 : vector<16x32xf32>
    %c0_43 = arith.constant 0 : index
    %c0_44 = arith.constant 0 : index
    %96 = vector.load %arg6[%c0_43, %c0_44] : memref<16x32xf32, #tpu.memory_space<vmem>>, vector<16x32xf32>
    tpu.vector_store %arg6[%c0_43, %c0_44], %95 {strides = array<i32>} : memref<16x32xf32, #tpu.memory_space<vmem>>, vector<16x32xf32>,
    return
  }
  func.func @transform_0(%arg0: i32) -> (i32, i32) {
    %c0_i32 = arith.constant 0 : i32
    %c0_i32_0 = arith.constant 0 : i32
    %c0_i32_1 = arith.constant 0 : i32
    return %c0_i32, %c0_i32_0 : i32, i32
  }
  func.func @transform_1(%arg0: i32) -> (i32, i32) {
    %c0_i32 = arith.constant 0 : i32
    %c0_i32_0 = arith.constant 0 : i32
    %c0_i32_1 = arith.constant 0 : i32
    return %c0_i32, %c0_i32_0 : i32, i32
  }
  func.func @transform_2(%arg0: i32) -> (i32, i32) {
    %c0_i32 = arith.constant 0 : i32
    %c0_i32_0 = arith.constant 0 : i32
    %c0_i32_1 = arith.constant 0 : i32
    return %c0_i32, %c0_i32_0 : i32, i32
  }
  func.func @transform_3(%arg0: i32) -> (i32, i32) {
    %c0_i32 = arith.constant 0 : i32
    %c0_i32_0 = arith.constant 0 : i32
    %c0_i32_1 = arith.constant 0 : i32
    return %c0_i32, %c0_i32_0 : i32, i32
  }
  func.func @transform_4(%arg0: i32) -> (i32, i32, i32) {
    %c0_i32 = arith.constant 0 : i32
    %c0_i32_0 = arith.constant 0 : i32
    %c0_i32_1 = arith.constant 0 : i32
    %c0_i32_2 = arith.constant 0 : i32
    return %c0_i32, %c0_i32_0, %c0_i32_1 : i32, i32, i32
  }
  func.func @transform_5(%arg0: i32) -> (i32, i32) {
    %c0_i32 = arith.constant 0 : i32
    %c0_i32_0 = arith.constant 0 : i32
    %c0_i32_1 = arith.constant 0 : i32
    return %c0_i32, %c0_i32_0 : i32, i32
  }
}

</mosaic_0001>

<llo_original>
// kernel: t5_layer_self_attention.1
$region0: #{t5_layer_self_attention.1}
  #allocation0 [shape = 'u32[]', space=smem, size = 0x4, offset = 0x4, fixed_abs, tag = 'smem constant byte address 0x4 - core index']
  #allocation1 [shape = 'u32[72,128]{1,0:T(1,128)}', space=vmem, size = 0x9000, scoped, tag = 'internal scratch']
  #allocation2 [shape = 'f32[16,32]{1,0:T(8,128)}', space=vmem, size = 0x2000, scoped, tag = 'scratch operand']
  %s0 = inlined_call_operand.vmem [shape: f32[16,32], index: 0, kind: input, shape index: {}]
  %s1 = inlined_call_operand.vmem [shape: f32[1,32], index: 1, kind: input, shape index: {}]
  %s2 = inlined_call_operand.vmem [shape: f32[32,96], index: 2, kind: input, shape index: {}]
  %s3 = inlined_call_operand.vmem [shape: f32[32,32], index: 3, kind: input, shape index: {}]
  %s4 = inlined_call_operand.vmem [shape: f32[4,16,16], index: 4, kind: input, shape index: {}]
  %s5 = inlined_call_operand.hbm [shape: f32[16,32], index: 5, kind: output, shape index: {}]
  %s6 = sld [smem:[#allocation0]]
  $region30: #{t5_layer_self_attention.1} parent=0
    _
  %s8 = ssub.s32 1, %s6
  %s9 = scalar_select 0, %s8, %s6
  $region1: #{t5_layer_self_attention.1} parent=0
    #allocation3 [shape = 'u8[8192]{0}', space=vmem, size = 0x2000, scoped, tag = 'output window, operand 0, single buffered']
    #allocation4 [shape = 's32[1]{0}', space=sflag, size = 0x4, scoped, tag = 'scoped memory for t5_layer_self_attention.1']
    %10 = vsyncpa [#allocation4], 0
    // Predicated region
    $region2: #{t5_layer_self_attention.1} parent=1 // pred_check
      _
    $region3: #{t5_layer_self_attention.1} parent=1 // pred_check_branch
      %12 = sbr.rel (0) target = $region5
    $region4: #{t5_layer_self_attention.1} parent=1 // pred_region
      _
    $region5: #{t5_layer_self_attention.1} parent=1 // pred_fallthru
      _
    // Predicated region
    $region6: #{t5_layer_self_attention.1} parent=1 // pred_check
      _
    $region7: #{t5_layer_self_attention.1} parent=1 // pred_check_branch
      %14 = sbr.rel (0) target = $region9
    $region8: #{t5_layer_self_attention.1} parent=1 // pred_region
      _
    $region9: #{t5_layer_self_attention.1} parent=1 // pred_fallthru
      _
    // Predicated region
    $region10: #{t5_layer_self_attention.1} parent=1 // pred_check
      _
    $region11: #{t5_layer_self_attention.1} parent=1 // pred_check_branch
      %16 = sbr.rel (0) target = $region13
    $region12: #{t5_layer_self_attention.1} parent=1 // pred_region
      _
    $region13: #{t5_layer_self_attention.1} parent=1 // pred_fallthru
      _
    // Predicated region
    $region14: #{t5_layer_self_attention.1} parent=1 // pred_check
      _
    $region15: #{t5_layer_self_attention.1} parent=1 // pred_check_branch
      %18 = sbr.rel (0) target = $region17
    $region16: #{t5_layer_self_attention.1} parent=1 // pred_region
      _
    $region17: #{t5_layer_self_attention.1} parent=1 // pred_fallthru
      _
    // Predicated region
    $region18: #{t5_layer_self_attention.1} parent=1 // pred_check
      _
    $region19: #{t5_layer_self_attention.1} parent=1 // pred_check_branch
      %20 = sbr.rel (0) target = $region21
    $region20: #{t5_layer_self_attention.1} parent=1 // pred_region
      _
    $region21: #{t5_layer_self_attention.1} parent=1 // pred_fallthru
      _
    %v21 = vld [vmem:[%s0] sm:$0xff]
    %v22 = vld [vmem:[%s0 + $0x8] sm:$0xff]
    %v23 = vmul.f32 %v21, %v21
    %v24 = vmul.f32 %v22, %v22
    %vm25 = vcmask 261120
    %v26 = vsel %vm25, %v23, 0.0
    %27 = vadd.xlane.f32.xlu0 %v26
    %v28 = vpop.xlane.xlu0 %27
    %v29 = vsel %vm25, %v24, 0.0
    %30 = vadd.xlane.f32.xlu0 %v29
    %v31 = vpop.xlane.xlu0 %30
    %v32 = vrcp.pop 32.0
    %v33 = vmul.f32 32.0, %v32
    %v34 = vsub.f32 1.0, %v33
    %v35 = vmul.f32 %v32, %v34
    %v36 = vadd.f32 %v32, %v35
    %vm37 = vweird.f32 %v32
    %v38 = vsel %vm37, %v32, %v36
    %v39 = vmul.f32 %v28, %v38
    %v40 = vmul.f32 %v31, %v38
    %v41 = vadd.f32 %v39, 1e-06
    %v42 = vadd.f32 %v40, 1e-06
    %v43 = vrsqrt.pop %v41
    %v44 = vmul.f32 %v43, %v41
    %v45 = vmul.f32 %v44, %v43
    %v46 = vmul.f32 0.5, %v45
    %v47 = vsub.f32 1.5, %v46
    %v48 = vmul.f32 %v43, %v47
    %vm49 = vweird.f32 %v41
    %vm50 = vweird.f32 %v43
    %vm51 = vmor %vm49, %vm50
    %v52 = vsel %vm51, %v43, %v48
    %v53 = vrsqrt.pop %v42
    %v54 = vmul.f32 %v53, %v42
    %v55 = vmul.f32 %v54, %v53
    %v56 = vmul.f32 0.5, %v55
    %v57 = vsub.f32 1.5, %v56
    %v58 = vmul.f32 %v53, %v57
    %vm59 = vweird.f32 %v42
    %vm60 = vweird.f32 %v53
    %vm61 = vmor %vm59, %vm60
    %v62 = vsel %vm61, %v53, %v58
    %v63 = vmul.f32 %v21, %v52
    %v64 = vmul.f32 %v22, %v62
    %v65 = vld [vmem:[%s1] sm:$0x1]
    %v67 = vperm.slane %v65, 0
    %v69 = vmul.f32 %v63, %v67
    %v70 = vmul.f32 %v64, %v67
    %v71 = vld [vmem:[%s2] sm:$0xff]
    %v72 = vld [vmem:[%s2 + $0x8] sm:$0xff]
    %v73 = vld [vmem:[%s2 + $0x10] sm:$0xff]
    %v74 = vld [vmem:[%s2 + $0x18] sm:$0xff]
    %v76 = vsel %vm25, %v69, 0
    %v79 = vsel %vm25, %v70, 0
    %81 = vmatpush.msra.mxu0 0.0
    %82 = vmatpush.msra.mxu0 0.0
    %83 = vmatpush.msra.mxu0 0.0
    %84 = vmatpush.msra.mxu0 0.0
    %85 = vmatpush.msra.mxu0 0.0
    %86 = vmatpush.msra.mxu0 0.0
    %87 = vmatpush.msra.mxu0 0.0
    %88 = vmatpush.msra.mxu0 0.0
    %89 = vmatpush.msra.mxu0 0.0
    %90 = vmatpush.msra.mxu0 0.0
    %91 = vmatpush.msra.mxu0 0.0
    %92 = vmatpush.msra.mxu0 0.0
    %93 = vmatpush.msra.mxu0 %v74
    %94 = vmatpush.msra.mxu0 %v73
    %95 = vmatpush.msra.mxu0 %v72
    %96 = vmatpush.msra.mxu0 %v71
    %97 = vmatmul.f32.gmra.mxu0 %v76
    %v98 = vpop.f32.mrf.mxu0
    %v99 = vadd.f32 0.0, %v98
    %100 = vmatmul.f32.gmra.mxu0 %v79
    %v101 = vpop.f32.mrf.mxu0
    %v102 = vadd.f32 0.0, %v101
    %103 = vdwg.mxu0
    %v104 = vld [vmem:[%s4] sm:$0xff]
    %v105 = vld [vmem:[%s4 + $0x8] sm:$0xff]
    %108 = vrot.lane.b32.xlu0 %v99, 96
    %v109 = vpop.permute.xlu0 %108
    %110 = vrot.lane.b32.xlu0 %v102, 96
    %v111 = vpop.permute.xlu0 %110
    %vm112 = vcmask 64512
    %v113 = vsel %vm112, %v99, 0
    %v115 = vsel %vm112, %v102, 0
    %v117 = vsel %vm112, %v109, 0
    %v119 = vsel %vm112, %v111, 0
    %121 = vmatpush.xpose.msra.mxu0 0.0
    %122 = vmatpush.xpose.msra.mxu0 0.0
    %123 = vmatpush.xpose.msra.mxu0 0.0
    %124 = vmatpush.xpose.msra.mxu0 0.0
    %125 = vmatpush.xpose.msra.mxu0 0.0
    %126 = vmatpush.xpose.msra.mxu0 0.0
    %127 = vmatpush.xpose.msra.mxu0 0.0
    %128 = vmatpush.xpose.msra.mxu0 0.0
    %129 = vmatpush.xpose.msra.mxu0 0.0
    %130 = vmatpush.xpose.msra.mxu0 0.0
    %131 = vmatpush.xpose.msra.mxu0 0.0
    %132 = vmatpush.xpose.msra.mxu0 0.0
    %133 = vmatpush.xpose.msra.mxu0 0.0
    %134 = vmatpush.xpose.msra.mxu0 0.0
    %135 = vmatpush.xpose.msra.mxu0 %v119
    %136 = vmatpush.xpose.msra.mxu0 %v117
    %137 = vmatmul.f32.gmra.mxu0 %v113
    %v138 = vpop.f32.mrf.mxu0
    %v139 = vadd.f32 %v104, %v138
    %140 = vmatmul.f32.gmra.mxu0 %v115
    %v141 = vpop.f32.mrf.mxu0
    %v142 = vadd.f32 %v105, %v141
    %143 = vdwg.mxu0
    %vm144 = vcmask 130048
    %v145 = vsel %vm144, %v139, -inf
    %146 = vmax.xlane.f32.xlu0 %v145
    %v147 = vpop.xlane.xlu0 %146
    %v148 = vsel %vm144, %v142, -inf
    %149 = vmax.xlane.f32.xlu0 %v148
    %v150 = vpop.xlane.xlu0 %149
    %v151 = vsub.f32 %v139, %v147
    %v152 = vsub.f32 %v142, %v150
    %v153 = vmul.f32 %v151, 1.442695
    %v154 = vpow.pop %v153
    %v155 = vmul.f32 %v152, 1.442695
    %v156 = vpow.pop %v155
    %v157 = vsel %vm144, %v154, 0.0
    %158 = vadd.xlane.f32.xlu0 %v157
    %v159 = vpop.xlane.xlu0 %158
    %v160 = vsel %vm144, %v156, 0.0
    %161 = vadd.xlane.f32.xlu0 %v160
    %v162 = vpop.xlane.xlu0 %161
    %v163 = vrcp.pop %v159
    %v164 = vrcp.pop %v162
    %v165 = vmul.f32 %v154, %v163
    %v166 = vmul.f32 %v156, %v164
    %167 = vrot.lane.b32.xlu0 %v99, 64
    %v168 = vpop.permute.xlu0 %167
    %169 = vrot.lane.b32.xlu0 %v102, 64
    %v170 = vpop.permute.xlu0 %169
    %v174 = vsel %vm144, %v165, 0
    %v177 = vsel %vm144, %v166, 0
    %179 = vmatpush.msra.mxu0 0.0
    %180 = vmatpush.msra.mxu0 0.0
    %181 = vmatpush.msra.mxu0 0.0
    %182 = vmatpush.msra.mxu0 0.0
    %183 = vmatpush.msra.mxu0 0.0
    %184 = vmatpush.msra.mxu0 0.0
    %185 = vmatpush.msra.mxu0 0.0
    %186 = vmatpush.msra.mxu0 0.0
    %187 = vmatpush.msra.mxu0 0.0
    %188 = vmatpush.msra.mxu0 0.0
    %189 = vmatpush.msra.mxu0 0.0
    %190 = vmatpush.msra.mxu0 0.0
    %191 = vmatpush.msra.mxu0 0.0
    %192 = vmatpush.msra.mxu0 0.0
    %193 = vmatpush.msra.mxu0 %v170
    %194 = vmatpush.msra.mxu0 %v168
    %195 = vmatmul.f32.gmra.mxu0 %v174
    %v196 = vpop.f32.mrf.mxu0
    %v197 = vadd.f32 0.0, %v196
    %198 = vmatmul.f32.gmra.mxu0 %v177
    %v199 = vpop.f32.mrf.mxu0
    %v200 = vadd.f32 0.0, %v199
    %201 = vdwg.mxu0
    %202 = vst.msk [vmem:[#allocation2] sm:$0xff] %vm112, %v197
    %203 = vst.msk [vmem:[#allocation2 + $0x8] sm:$0xff] %vm112, %v200
    %s204 = scalar_lea.vmem %s4, 16
    %v205 = vld [vmem:[%s204] sm:$0xff]
    %v206 = vld [vmem:[%s204 + $0x8] sm:$0xff]
    %207 = vrot.lane.b32.xlu0 %v99, 120
    %v208 = vpop.permute.xlu0 %207
    %209 = vrot.lane.b32.xlu0 %v102, 120
    %v210 = vpop.permute.xlu0 %209
    %211 = vrot.lane.b32.xlu0 %v99, 88
    %v212 = vpop.permute.xlu0 %211
    %213 = vrot.lane.b32.xlu0 %v102, 88
    %v214 = vpop.permute.xlu0 %213
    %v215 = vsel %vm112, %v208, 0
    %v217 = vsel %vm112, %v210, 0
    %v219 = vsel %vm112, %v212, 0
    %v221 = vsel %vm112, %v214, 0
    %223 = vmatpush.xpose.msra.mxu0 0.0
    %224 = vmatpush.xpose.msra.mxu0 0.0
    %225 = vmatpush.xpose.msra.mxu0 0.0
    %226 = vmatpush.xpose.msra.mxu0 0.0
    %227 = vmatpush.xpose.msra.mxu0 0.0
    %228 = vmatpush.xpose.msra.mxu0 0.0
    %229 = vmatpush.xpose.msra.mxu0 0.0
    %230 = vmatpush.xpose.msra.mxu0 0.0
    %231 = vmatpush.xpose.msra.mxu0 0.0
    %232 = vmatpush.xpose.msra.mxu0 0.0
    %233 = vmatpush.xpose.msra.mxu0 0.0
    %234 = vmatpush.xpose.msra.mxu0 0.0
    %235 = vmatpush.xpose.msra.mxu0 0.0
    %236 = vmatpush.xpose.msra.mxu0 0.0
    %237 = vmatpush.xpose.msra.mxu0 %v221
    %238 = vmatpush.xpose.msra.mxu0 %v219
    %239 = vmatmul.f32.gmra.mxu0 %v215
    %v240 = vpop.f32.mrf.mxu0
    %v241 = vadd.f32 %v205, %v240
    %242 = vmatmul.f32.gmra.mxu0 %v217
    %v243 = vpop.f32.mrf.mxu0
    %v244 = vadd.f32 %v206, %v243
    %245 = vdwg.mxu0
    %v246 = vsel %vm144, %v241, -inf
    %247 = vmax.xlane.f32.xlu0 %v246
    %v248 = vpop.xlane.xlu0 %247
    %v249 = vsel %vm144, %v244, -inf
    %250 = vmax.xlane.f32.xlu0 %v249
    %v251 = vpop.xlane.xlu0 %250
    %v252 = vsub.f32 %v241, %v248
    %v253 = vsub.f32 %v244, %v251
    %v254 = vmul.f32 %v252, 1.442695
    %v255 = vpow.pop %v254
    %v256 = vmul.f32 %v253, 1.442695
    %v257 = vpow.pop %v256
    %v258 = vsel %vm144, %v255, 0.0
    %259 = vadd.xlane.f32.xlu0 %v258
    %v260 = vpop.xlane.xlu0 %259
    %v261 = vsel %vm144, %v257, 0.0
    %262 = vadd.xlane.f32.xlu0 %v261
    %v263 = vpop.xlane.xlu0 %262
    %v264 = vrcp.pop %v260
    %v265 = vrcp.pop %v263
    %v266 = vmul.f32 %v255, %v264
    %v267 = vmul.f32 %v257, %v265
    %268 = vrot.lane.b32.xlu0 %v99, 56
    %v269 = vpop.permute.xlu0 %268
    %270 = vrot.lane.b32.xlu0 %v102, 56
    %v271 = vpop.permute.xlu0 %270
    %v275 = vsel %vm144, %v266, 0
    %v278 = vsel %vm144, %v267, 0
    %280 = vmatpush.msra.mxu0 0.0
    %281 = vmatpush.msra.mxu0 0.0
    %282 = vmatpush.msra.mxu0 0.0
    %283 = vmatpush.msra.mxu0 0.0
    %284 = vmatpush.msra.mxu0 0.0
    %285 = vmatpush.msra.mxu0 0.0
    %286 = vmatpush.msra.mxu0 0.0
    %287 = vmatpush.msra.mxu0 0.0
    %288 = vmatpush.msra.mxu0 0.0
    %289 = vmatpush.msra.mxu0 0.0
    %290 = vmatpush.msra.mxu0 0.0
    %291 = vmatpush.msra.mxu0 0.0
    %292 = vmatpush.msra.mxu0 0.0
    %293 = vmatpush.msra.mxu0 0.0
    %294 = vmatpush.msra.mxu0 %v271
    %295 = vmatpush.msra.mxu0 %v269
    %296 = vmatmul.f32.gmra.mxu0 %v275
    %v297 = vpop.f32.mrf.mxu0
    %v298 = vadd.f32 0.0, %v297
    %299 = vmatmul.f32.gmra.mxu0 %v278
    %v300 = vpop.f32.mrf.mxu0
    %v301 = vadd.f32 0.0, %v300
    %302 = vdwg.mxu0
    %305 = vrot.lane.b32.xlu0 %v298, 8
    %v306 = vpop.permute.xlu0 %305
    %307 = vrot.lane.b32.xlu0 %v301, 8
    %v308 = vpop.permute.xlu0 %307
    %vm311 = vcmask 130112
    %312 = vst.msk [vmem:[#allocation2] sm:$0xff] %vm311, %v306
    %313 = vst.msk [vmem:[#allocation2 + $0x8] sm:$0xff] %vm311, %v308
    %s314 = scalar_lea.vmem %s4, 32
    %v315 = vld [vmem:[%s314] sm:$0xff]
    %v316 = vld [vmem:[%s314 + $0x8] sm:$0xff]
    %317 = vrot.lane.b32.xlu0 %v99, 112
    %v318 = vpop.permute.xlu0 %317
    %319 = vrot.lane.b32.xlu0 %v102, 112
    %v320 = vpop.permute.xlu0 %319
    %321 = vrot.lane.b32.xlu0 %v99, 80
    %v322 = vpop.permute.xlu0 %321
    %323 = vrot.lane.b32.xlu0 %v102, 80
    %v324 = vpop.permute.xlu0 %323
    %v325 = vsel %vm112, %v318, 0
    %v327 = vsel %vm112, %v320, 0
    %v329 = vsel %vm112, %v322, 0
    %v331 = vsel %vm112, %v324, 0
    %333 = vmatpush.xpose.msra.mxu0 0.0
    %334 = vmatpush.xpose.msra.mxu0 0.0
    %335 = vmatpush.xpose.msra.mxu0 0.0
    %336 = vmatpush.xpose.msra.mxu0 0.0
    %337 = vmatpush.xpose.msra.mxu0 0.0
    %338 = vmatpush.xpose.msra.mxu0 0.0
    %339 = vmatpush.xpose.msra.mxu0 0.0
    %340 = vmatpush.xpose.msra.mxu0 0.0
    %341 = vmatpush.xpose.msra.mxu0 0.0
    %342 = vmatpush.xpose.msra.mxu0 0.0
    %343 = vmatpush.xpose.msra.mxu0 0.0
    %344 = vmatpush.xpose.msra.mxu0 0.0
    %345 = vmatpush.xpose.msra.mxu0 0.0
    %346 = vmatpush.xpose.msra.mxu0 0.0
    %347 = vmatpush.xpose.msra.mxu0 %v331
    %348 = vmatpush.xpose.msra.mxu0 %v329
    %349 = vmatmul.f32.gmra.mxu0 %v325
    %v350 = vpop.f32.mrf.mxu0
    %v351 = vadd.f32 %v315, %v350
    %352 = vmatmul.f32.gmra.mxu0 %v327
    %v353 = vpop.f32.mrf.mxu0
    %v354 = vadd.f32 %v316, %v353
    %355 = vdwg.mxu0
    %v356 = vsel %vm144, %v351, -inf
    %357 = vmax.xlane.f32.xlu0 %v356
    %v358 = vpop.xlane.xlu0 %357
    %v359 = vsel %vm144, %v354, -inf
    %360 = vmax.xlane.f32.xlu0 %v359
    %v361 = vpop.xlane.xlu0 %360
    %v362 = vsub.f32 %v351, %v358
    %v363 = vsub.f32 %v354, %v361
    %v364 = vmul.f32 %v362, 1.442695
    %v365 = vpow.pop %v364
    %v366 = vmul.f32 %v363, 1.442695
    %v367 = vpow.pop %v366
    %v368 = vsel %vm144, %v365, 0.0
    %369 = vadd.xlane.f32.xlu0 %v368
    %v370 = vpop.xlane.xlu0 %369
    %v371 = vsel %vm144, %v367, 0.0
    %372 = vadd.xlane.f32.xlu0 %v371
    %v373 = vpop.xlane.xlu0 %372
    %v374 = vrcp.pop %v370
    %v375 = vrcp.pop %v373
    %v376 = vmul.f32 %v365, %v374
    %v377 = vmul.f32 %v367, %v375
    %378 = vrot.lane.b32.xlu0 %v99, 48
    %v379 = vpop.permute.xlu0 %378
    %380 = vrot.lane.b32.xlu0 %v102, 48
    %v381 = vpop.permute.xlu0 %380
    %v385 = vsel %vm144, %v376, 0
    %v388 = vsel %vm144, %v377, 0
    %390 = vmatpush.msra.mxu0 0.0
    %391 = vmatpush.msra.mxu0 0.0
    %392 = vmatpush.msra.mxu0 0.0
    %393 = vmatpush.msra.mxu0 0.0
    %394 = vmatpush.msra.mxu0 0.0
    %395 = vmatpush.msra.mxu0 0.0
    %396 = vmatpush.msra.mxu0 0.0
    %397 = vmatpush.msra.mxu0 0.0
    %398 = vmatpush.msra.mxu0 0.0
    %399 = vmatpush.msra.mxu0 0.0
    %400 = vmatpush.msra.mxu0 0.0
    %401 = vmatpush.msra.mxu0 0.0
    %402 = vmatpush.msra.mxu0 0.0
    %403 = vmatpush.msra.mxu0 0.0
    %404 = vmatpush.msra.mxu0 %v381
    %405 = vmatpush.msra.mxu0 %v379
    %406 = vmatmul.f32.gmra.mxu0 %v385
    %v407 = vpop.f32.mrf.mxu0
    %v408 = vadd.f32 0.0, %v407
    %409 = vmatmul.f32.gmra.mxu0 %v388
    %v410 = vpop.f32.mrf.mxu0
    %v411 = vadd.f32 0.0, %v410
    %412 = vdwg.mxu0
    %415 = vrot.lane.b32.xlu0 %v408, 16
    %v416 = vpop.permute.xlu0 %415
    %417 = vrot.lane.b32.xlu0 %v411, 16
    %v418 = vpop.permute.xlu0 %417
    %vm421 = vcmask 195712
    %422 = vst.msk [vmem:[#allocation2] sm:$0xff] %vm421, %v416
    %423 = vst.msk [vmem:[#allocation2 + $0x8] sm:$0xff] %vm421, %v418
    %s424 = scalar_lea.vmem %s4, 48
    %v425 = vld [vmem:[%s424] sm:$0xff]
    %v426 = vld [vmem:[%s424 + $0x8] sm:$0xff]
    %427 = vrot.lane.b32.xlu0 %v99, 104
    %v428 = vpop.permute.xlu0 %427
    %429 = vrot.lane.b32.xlu0 %v102, 104
    %v430 = vpop.permute.xlu0 %429
    %431 = vrot.lane.b32.xlu0 %v99, 72
    %v432 = vpop.permute.xlu0 %431
    %433 = vrot.lane.b32.xlu0 %v102, 72
    %v434 = vpop.permute.xlu0 %433
    %v435 = vsel %vm112, %v428, 0
    %v437 = vsel %vm112, %v430, 0
    %v439 = vsel %vm112, %v432, 0
    %v441 = vsel %vm112, %v434, 0
    %443 = vmatpush.xpose.msra.mxu0 0.0
    %444 = vmatpush.xpose.msra.mxu0 0.0
    %445 = vmatpush.xpose.msra.mxu0 0.0
    %446 = vmatpush.xpose.msra.mxu0 0.0
    %447 = vmatpush.xpose.msra.mxu0 0.0
    %448 = vmatpush.xpose.msra.mxu0 0.0
    %449 = vmatpush.xpose.msra.mxu0 0.0
    %450 = vmatpush.xpose.msra.mxu0 0.0
    %451 = vmatpush.xpose.msra.mxu0 0.0
    %452 = vmatpush.xpose.msra.mxu0 0.0
    %453 = vmatpush.xpose.msra.mxu0 0.0
    %454 = vmatpush.xpose.msra.mxu0 0.0
    %455 = vmatpush.xpose.msra.mxu0 0.0
    %456 = vmatpush.xpose.msra.mxu0 0.0
    %457 = vmatpush.xpose.msra.mxu0 %v441
    %458 = vmatpush.xpose.msra.mxu0 %v439
    %459 = vmatmul.f32.gmra.mxu0 %v435
    %v460 = vpop.f32.mrf.mxu0
    %v461 = vadd.f32 %v425, %v460
    %462 = vmatmul.f32.gmra.mxu0 %v437
    %v463 = vpop.f32.mrf.mxu0
    %v464 = vadd.f32 %v426, %v463
    %465 = vdwg.mxu0
    %v466 = vsel %vm144, %v461, -inf
    %467 = vmax.xlane.f32.xlu0 %v466
    %v468 = vpop.xlane.xlu0 %467
    %v469 = vsel %vm144, %v464, -inf
    %470 = vmax.xlane.f32.xlu0 %v469
    %v471 = vpop.xlane.xlu0 %470
    %v472 = vsub.f32 %v461, %v468
    %v473 = vsub.f32 %v464, %v471
    %v474 = vmul.f32 %v472, 1.442695
    %v475 = vpow.pop %v474
    %v476 = vmul.f32 %v473, 1.442695
    %v477 = vpow.pop %v476
    %v478 = vsel %vm144, %v475, 0.0
    %479 = vadd.xlane.f32.xlu0 %v478
    %v480 = vpop.xlane.xlu0 %479
    %v481 = vsel %vm144, %v477, 0.0
    %482 = vadd.xlane.f32.xlu0 %v481
    %v483 = vpop.xlane.xlu0 %482
    %v484 = vrcp.pop %v480
    %v485 = vrcp.pop %v483
    %v486 = vmul.f32 %v475, %v484
    %v487 = vmul.f32 %v477, %v485
    %488 = vrot.lane.b32.xlu0 %v99, 40
    %v489 = vpop.permute.xlu0 %488
    %490 = vrot.lane.b32.xlu0 %v102, 40
    %v491 = vpop.permute.xlu0 %490
    %v495 = vsel %vm144, %v486, 0
    %v498 = vsel %vm144, %v487, 0
    %500 = vmatpush.msra.mxu0 0.0
    %501 = vmatpush.msra.mxu0 0.0
    %502 = vmatpush.msra.mxu0 0.0
    %503 = vmatpush.msra.mxu0 0.0
    %504 = vmatpush.msra.mxu0 0.0
    %505 = vmatpush.msra.mxu0 0.0
    %506 = vmatpush.msra.mxu0 0.0
    %507 = vmatpush.msra.mxu0 0.0
    %508 = vmatpush.msra.mxu0 0.0
    %509 = vmatpush.msra.mxu0 0.0
    %510 = vmatpush.msra.mxu0 0.0
    %511 = vmatpush.msra.mxu0 0.0
    %512 = vmatpush.msra.mxu0 0.0
    %513 = vmatpush.msra.mxu0 0.0
    %514 = vmatpush.msra.mxu0 %v491
    %515 = vmatpush.msra.mxu0 %v489
    %516 = vmatmul.f32.gmra.mxu0 %v495
    %v517 = vpop.f32.mrf.mxu0
    %v518 = vadd.f32 0.0, %v517
    %519 = vmatmul.f32.gmra.mxu0 %v498
    %v520 = vpop.f32.mrf.mxu0
    %v521 = vadd.f32 0.0, %v520
    %522 = vdwg.mxu0
    %525 = vrot.lane.b32.xlu0 %v518, 24
    %v526 = vpop.permute.xlu0 %525
    %527 = vrot.lane.b32.xlu0 %v521, 24
    %v528 = vpop.permute.xlu0 %527
    %vm531 = vcmask 261312
    %532 = vst.msk [vmem:[#allocation2] sm:$0xff] %vm531, %v526
    %533 = vst.msk [vmem:[#allocation2 + $0x8] sm:$0xff] %vm531, %v528
    %v534 = vld [vmem:[#allocation2] sm:$0xff]
    %v535 = vld [vmem:[#allocation2 + $0x8] sm:$0xff]
    %v536 = vld [vmem:[%s3] sm:$0xff]
    %v537 = vld [vmem:[%s3 + $0x8] sm:$0xff]
    %v538 = vld [vmem:[%s3 + $0x10] sm:$0xff]
    %v539 = vld [vmem:[%s3 + $0x18] sm:$0xff]
    %v541 = vsel %vm25, %v534, 0
    %v544 = vsel %vm25, %v535, 0
    %546 = vmatpush.msra.mxu0 0.0
    %547 = vmatpush.msra.mxu0 0.0
    %548 = vmatpush.msra.mxu0 0.0
    %549 = vmatpush.msra.mxu0 0.0
    %550 = vmatpush.msra.mxu0 0.0
    %551 = vmatpush.msra.mxu0 0.0
    %552 = vmatpush.msra.mxu0 0.0
    %553 = vmatpush.msra.mxu0 0.0
    %554 = vmatpush.msra.mxu0 0.0
    %555 = vmatpush.msra.mxu0 0.0
    %556 = vmatpush.msra.mxu0 0.0
    %557 = vmatpush.msra.mxu0 0.0
    %558 = vmatpush.msra.mxu0 %v539
    %559 = vmatpush.msra.mxu0 %v538
    %560 = vmatpush.msra.mxu0 %v537
    %561 = vmatpush.msra.mxu0 %v536
    %562 = vmatmul.f32.gmra.mxu0 %v541
    %v563 = vpop.f32.mrf.mxu0
    %v564 = vadd.f32 0.0, %v563
    %565 = vmatmul.f32.gmra.mxu0 %v544
    %v566 = vpop.f32.mrf.mxu0
    %v567 = vadd.f32 0.0, %v566
    %568 = vdwg.mxu0
    %v569 = vadd.f32 %v21, %v564
    %v570 = vadd.f32 %v22, %v567
    %571 = vst.msk [vmem:[#allocation3] sm:$0xff] %vm25, %v569
    %572 = vst.msk [vmem:[#allocation3 + $0x8] sm:$0xff] %vm25, %v570
    // Predicated region
    $region22: #{t5_layer_self_attention.1} parent=1 // pred_check
      _
    $region23: #{t5_layer_self_attention.1} parent=1 // pred_check_branch
      %574 = sbr.rel (0) target = $region25
    $region24: #{t5_layer_self_attention.1} parent=1 // pred_region
      %576 = vsyncadd [#allocation4], 0
      %s577 = sshll.u32 [#allocation3], 4
      %s578 = int_to_ptr.vmem [resolvable:$true] %s577
      %s579 = sshll.u32 %s5, 4
      %s580 = int_to_ptr.hbm [resolvable:$true] %s579
      %585 = dma.vmem_to_hbm [thread:$0]  %s578, 256, %s580, [#allocation4], 128, 128, 8
    $region25: #{t5_layer_self_attention.1} parent=1 // pred_fallthru
      _
    // Predicated region
    $region26: #{t5_layer_self_attention.1} parent=1 // pred_check
      _
    $region27: #{t5_layer_self_attention.1} parent=1 // pred_check_branch
      %587 = sbr.rel (0) target = $region29
    $region28: #{t5_layer_self_attention.1} parent=1 // pred_region
      %589 = dma.done [#allocation4], 256
    $region29: #{t5_layer_self_attention.1} parent=1 // pred_fallthru
      _
    %590 = vsyncpa [#allocation4], 1

</llo_original>
